<compile_context>
chip_gen: v7x
topology: tpu7x:2x2x1
jax: 0.10.0
libtpu: 0.0.40
codegen_flags: <defaults>
</compile_context>

<pallas_src>
import functools
import math

import jax
import jax.numpy as jnp
from jax.experimental import pallas as pl
from jax.experimental.pallas import tpu as pltpu


# ----------------------------------------------------------------------------
# Kernel
# ----------------------------------------------------------------------------
def _polar_kernel(x_ref, w_ref, b_ref, o_ref):
    """x_ref: (tm, Din), w_ref: (Din, Dout), b_ref: (1, Dout), o_ref: (tm, Dout).

    Columns are class-major interleaved (and possibly row-group packed), so in
    every supported layout head == column & 3:
      head 0 -> sigmoid, head 1/2 -> tanh, head 3 -> relu.
    """
    y = jnp.dot(x_ref[...], w_ref[...], preferred_element_type=jnp.float32)
    y = y + b_ref[...]                                   # (1, Dout) broadcast

    head = jax.lax.broadcasted_iota(jnp.int32, y.shape, dimension=1) & 3
    # One EUP pass: sigmoid(y) for head 0; tanh(y) = 2*sigmoid(2y) - 1 for
    # heads 1/2 (stable for all y, no overflow); relu for head 3.
    z = jnp.where(head == 0, y, 2.0 * y)
    sig = jax.nn.sigmoid(z)
    act = jnp.where(head == 3, jnp.maximum(y, 0.0),
                    jnp.where(head == 0, sig, 2.0 * sig - 1.0))
    o_ref[...] = act.astype(o_ref.dtype)


# ----------------------------------------------------------------------------
# Sizing helpers
# ----------------------------------------------------------------------------
def _cdiv(a, b):
    return (a + b - 1) // b


def _round_up(v, m):
    return ((v + m - 1) // m) * m


@functools.lru_cache(maxsize=1)
def _vmem_budget():
    """Generation-aware VMEM sizing.

    v5e/v6e: 128 MiB per core -> ~96 MiB scoped limit / ~64 MiB tile budget.
    v7x:      64 MiB          -> ~48 MiB / ~32 MiB.
    Falls back to the v7x-safe numbers if the hardware query is unavailable.
    """
    phys = 64 << 20
    try:
        phys = int(pltpu.get_tpu_info().vmem_capacity_bytes)
        if phys <= 0:
            phys = 64 << 20
    except Exception:
        phys = 64 << 20
    limit = int(min((phys * 3) // 4, 112 << 20))
    budget = int((limit * 2) // 3)
    return budget, limit


def _pick_tm(m_rows, in_row_bytes, out_row_bytes, resident_bytes,
             vmem_budget_bytes, num_cores=2, tm_cap=2048):
    """Largest sublane-aligned row tile that fits the VMEM budget.

    * input/output tiles are double-buffered by the pipeline (x2),
    * the constant-index weight/bias blocks are budgeted as double-buffered
      too (x2) so a large fused weight cannot blow v7x's 64 MiB VMEM,
    * tm is capped so the grid has >= num_cores steps for mid/large M, letting
      the 'parallel' axis shard across both v7x TensorCores.
    """
    if m_rows <= 8:
        return int(m_rows)                     # single full-extent block
    per_row = 2 * (in_row_bytes + out_row_bytes)
    avail = max(vmem_budget_bytes - 2 * resident_bytes, 1 << 20)
    tm = min(avail // per_row, tm_cap)
    if m_rows >= 16 * num_cores:
        tm = min(tm, _round_up(_cdiv(m_rows, num_cores), 8))
    tm = min(tm, _round_up(m_rows, 8))
    tm = max(8, (tm // 8) * 8)
    return int(tm)


def pick_group(num_classes, rows=None, max_group=8):
    """Row-group size G so that G*4C approaches a multiple of 128 (lane-dense
    output).  G consecutive (B*T) rows share one kernel output row; the
    grouping of x and out are pure row-major reshapes, only the weight is
    expanded to a block-diagonal [G*D, G*4C] once at prep time."""
    c4 = 4 * num_classes
    g = 128 // math.gcd(c4, 128)
    if g > max_group:
        # TODO(synk): two-level packing for awkward 4C (e.g. 4C=52 -> G=32).
        return 1
    if rows is not None:
        while g > 1 and rows % g:
            g //= 2
    return int(g)


# ----------------------------------------------------------------------------
# One-time parameter prep (hoisted out of the forward pass)
# ----------------------------------------------------------------------------
def prepare_polar_params(w_stack, b_stack, num_classes, *, group=1,
                         param_dtype=jnp.bfloat16):
    """w_stack: [D, 4C] = [W_sa | W_az | W_el | W_dist], b_stack: [4C].

    * permutes columns to class-major interleave (col = class*4 + head) so the
      kernel output reshapes to [..., C, 4] as a view,
    * optionally expands to a block-diagonal [G*D, G*4C] weight so G row-groups
      share one lane-dense output row,
    * casts the weight to `param_dtype` (bf16 fast path); bias stays f32 since
      it is added post-MXU in f32.
    Call once per parameter set, not per forward call.
    """
    D, c4 = w_stack.shape
    C = num_classes
    assert c4 == 4 * C
    j = jnp.arange(c4)
    perm = (j % 4) * C + (j // 4)
    w_il = w_stack[:, perm].astype(param_dtype)
    b_il = b_stack[perm].astype(jnp.float32)
    if group > 1:
        eye = jnp.eye(group, dtype=param_dtype)
        # block-diag: w_g[g*D + d, g*4C + c] = w_il[d, c] if same g else 0
        w_il = jnp.einsum("gh,dc->gdhc", eye, w_il).reshape(group * D, group * c4)
        b_il = jnp.tile(b_il, group)
    return w_il, b_il.reshape(1, -1)


# ----------------------------------------------------------------------------
# Forward
# ----------------------------------------------------------------------------
def polar_localization_output(x, w_prepared, b_prepared, num_classes, *,
                              out_dtype=None):
    """x: [B, T, D] (f32 or bf16); params from prepare_polar_params().
    Returns [B, T, C, 4] with last axis (source_activity, azimuth, elevation,
    distance)."""
    B, T, D = x.shape
    C = num_classes
    M = B * T
    Din, Dout = w_prepared.shape
    G = Din // D
    assert Din == G * D and Dout == G * 4 * C, "weight not prepared for this D/C"
    assert M % G == 0, "B*T must be divisible by the row-group size"
    if out_dtype is None:
        out_dtype = x.dtype

    m_rows = M // G
    x2d = x.reshape(m_rows, Din)          # pure row-major view, no copy/cast
    b2d = b_prepared.reshape(1, Dout)

    budget, vmem_limit = _vmem_budget()
    in_row = Din * x2d.dtype.itemsize
    out_row = Dout * jnp.dtype(out_dtype).itemsize
    resident = (w_prepared.size * w_prepared.dtype.itemsize
                + b2d.size * b2d.dtype.itemsize)
    tm = _pick_tm(m_rows, in_row, out_row, resident, budget)
    grid = (_cdiv(m_rows, tm),)

    out2d = pl.pallas_call(
        _polar_kernel,
        out_shape=jax.ShapeDtypeStruct((m_rows, Dout), out_dtype),
        grid_spec=pltpu.PrefetchScalarGridSpec(
            num_scalar_prefetch=0,
            grid=grid,
            in_specs=[
                # x rows: default Buffered(2); deeper pipelining only eats VMEM
                # since the pipeline is DMA-limited.
                pl.BlockSpec((tm, Din), lambda i: (i, 0)),
                pl.BlockSpec((Din, Dout), lambda i: (0, 0)),   # resident weight
                pl.BlockSpec((1, Dout), lambda i: (0, 0)),     # resident bias
            ],
            out_specs=pl.BlockSpec((tm, Dout), lambda i: (i, 0)),
        ),
        compiler_params=pltpu.CompilerParams(
            dimension_semantics=("parallel",),
            vmem_limit_bytes=vmem_limit,
        ),
    )(x2d, w_prepared, b2d)

    # Interleaved (class-major) columns + row-grouping are both pure views of
    # the [B, T, C, 4] row-major layout -- no post-kernel transpose.
    return out2d.reshape(B, T, C, 4)


# ----------------------------------------------------------------------------
# Pure-JAX reference (mirrors the PyTorch forward)
# ----------------------------------------------------------------------------
def _reference(x, w_stack, b_stack, num_classes):
    C = num_classes
    y = jnp.einsum("btd,dn->btn", x, w_stack) + b_stack
    sa = jax.nn.sigmoid(y[..., 0 * C:1 * C])
    az = jnp.tanh(y[..., 1 * C:2 * C])
    el = jnp.tanh(y[..., 2 * C:3 * C])
    di = jnp.maximum(y[..., 3 * C:4 * C], 0.0)
    return jnp.stack([sa, az, el, di], axis=-1)


if __name__ == "__main__":
    key = jax.random.PRNGKey(0)
    B, T, D, C = 2, 8, 32, 8           # batch, seq, input_dim, num_classes

    k_x, k_w, k_b = jax.random.split(key, 3)
    x = jax.random.normal(k_x, (B, T, D), dtype=jnp.float32)

    # PyTorch-Linear-style init, stacked as [W_sa | W_az | W_el | W_dist].
    bound = 1.0 / math.sqrt(D)
    w_stack = jax.random.uniform(k_w, (D, 4 * C), jnp.float32, -bound, bound)
    b_stack = jax.random.uniform(k_b, (4 * C,), jnp.float32, -bound, bound)

    ref = _reference(x, w_stack, b_stack, C)
    G = pick_group(C, rows=B * T)      # 4C=32 -> G=4 -> 128-lane-dense output

    # --- exact (f32) path: preserves the module's numerics ------------------
    w32, b32 = prepare_polar_params(w_stack, b_stack, C, group=G,
                                    param_dtype=jnp.float32)
    out32 = jax.block_until_ready(
        polar_localization_output(x, w32, b32, C, out_dtype=jnp.float32))
    assert out32.shape == (B, T, C, 4), out32.shape
    assert jnp.allclose(out32, ref, atol=2e-5, rtol=1e-5), "f32 mismatch"

    # --- bf16 fast path: halves dominant HBM read/write traffic -------------
    wbf, bbf = prepare_polar_params(w_stack, b_stack, C, group=G,
                                    param_dtype=jnp.bfloat16)
    outbf = jax.block_until_ready(
        polar_localization_output(x.astype(jnp.bfloat16), wbf, bbf, C,
                                  out_dtype=jnp.bfloat16))
    assert outbf.shape == (B, T, C, 4), outbf.shape
    assert jnp.allclose(outbf.astype(jnp.float32), ref, atol=5e-2, rtol=5e-2), \
        "bf16 mismatch"

    print("KERNEL_OK")
</pallas_src>

<mosaic_0001>
module attributes {stable_mosaic.version = 11 : i64} {
  func.func @_polar_kernel(%arg0: i32, %arg1: memref<4x128xf32, #tpu.memory_space<vmem>>, %arg2: memref<128x128xf32, #tpu.memory_space<vmem>>, %arg3: memref<1x128xf32, #tpu.memory_space<vmem>>, %arg4: memref<4x128xf32, #tpu.memory_space<vmem>>) attributes {dimension_semantics = [#tpu.dimension_semantics<parallel>], iteration_bounds = array<i64: 1>, scalar_prefetch = 0 : i64, scratch_operands = 0 : i64, tpu.core_type = #tpu.core_type<tc>, window_params = [{transform_indices = @transform_0, window_bounds = array<i64: 4, 128>}, {pipeline_mode = #tpu.pipeline_mode<synchronous>, transform_indices = @transform_1, window_bounds = array<i64: 128, 128>}, {pipeline_mode = #tpu.pipeline_mode<synchronous>, transform_indices = @transform_2, window_bounds = array<i64: 1, 128>}, {transform_indices = @transform_3, window_bounds = array<i64: 4, 128>}]} {
    %c0 = arith.constant 0 : index
    %c0_0 = arith.constant 0 : index
    %0 = vector.load %arg1[%c0, %c0_0] : memref<4x128xf32, #tpu.memory_space<vmem>>, vector<4x128xf32>
    %c0_1 = arith.constant 0 : index
    %c0_2 = arith.constant 0 : index
    %1 = vector.load %arg2[%c0_1, %c0_2] : memref<128x128xf32, #tpu.memory_space<vmem>>, vector<128x128xf32>
    %cst = arith.constant dense<0.000000e+00> : vector<4x128xf32>
    %2 = tpu.matmul %0, %1, %cst {dimension_numbers = #tpu.dot_dimension_numbers<[1], [0], [0], [1], [0, 0, 1, 1], [], []>} : vector<4x128xf32>, vector<128x128xf32>, vector<4x128xf32> -> vector<4x128xf32>
    %c0_3 = arith.constant 0 : index
    %c0_4 = arith.constant 0 : index
    %3 = vector.load %arg3[%c0_3, %c0_4] : memref<1x128xf32, #tpu.memory_space<vmem>>, vector<1x128xf32>
    %4 = vector.broadcast %3 : vector<1x128xf32> to vector<4x128xf32>
    %5 = arith.addf %2, %4 : vector<4x128xf32>
    %6 = tpu.iota {dimensions = array<i32: 1>} : vector<4x128xi32>
    %c3_i32 = arith.constant 3 : i32
    %7 = vector.broadcast %c3_i32 : i32 to vector<4x128xi32>
    %8 = arith.andi %6, %7 : vector<4x128xi32>
    %c0_i32 = arith.constant 0 : i32
    %9 = vector.broadcast %c0_i32 : i32 to vector<4x128xi32>
    %10 = arith.cmpi eq, %8, %9 : vector<4x128xi32>
    %cst_5 = arith.constant 2.000000e+00 : f32
    %11 = vector.broadcast %cst_5 : f32 to vector<4x128xf32>
    %12 = arith.mulf %11, %5 : vector<4x128xf32>
    %13 = arith.select %10, %5, %12 : vector<4x128xi1>, vector<4x128xf32>
    %14 = arith.negf %13 : vector<4x128xf32>
    %15 = math.exp %14 : vector<4x128xf32>
    %cst_6 = arith.constant 1.000000e+00 : f32
    %16 = vector.broadcast %cst_6 : f32 to vector<4x128xf32>
    %17 = arith.addf %16, %15 : vector<4x128xf32>
    %18 = arith.divf %16, %17 : vector<4x128xf32>
    %c3_i32_7 = arith.constant 3 : i32
    %19 = vector.broadcast %c3_i32_7 : i32 to vector<4x128xi32>
    %20 = arith.cmpi eq, %8, %19 : vector<4x128xi32>
    %cst_8 = arith.constant 0.000000e+00 : f32
    %21 = vector.broadcast %cst_8 : f32 to vector<4x128xf32>
    %22 = arith.maximumf %5, %21 : vector<4x128xf32>
    %c0_i32_9 = arith.constant 0 : i32
    %23 = vector.broadcast %c0_i32_9 : i32 to vector<4x128xi32>
    %24 = arith.cmpi eq, %8, %23 : vector<4x128xi32>
    %cst_10 = arith.constant 2.000000e+00 : f32
    %25 = vector.broadcast %cst_10 : f32 to vector<4x128xf32>
    %26 = arith.mulf %25, %18 : vector<4x128xf32>
    %cst_11 = arith.constant 1.000000e+00 : f32
    %27 = vector.broadcast %cst_11 : f32 to vector<4x128xf32>
    %28 = arith.subf %26, %27 : vector<4x128xf32>
    %29 = arith.select %24, %18, %28 : vector<4x128xi1>, vector<4x128xf32>
    %30 = arith.select %20, %22, %29 : vector<4x128xi1>, vector<4x128xf32>
    %c0_12 = arith.constant 0 : index
    %c0_13 = arith.constant 0 : index
    %31 = vector.load %arg4[%c0_12, %c0_13] : memref<4x128xf32, #tpu.memory_space<vmem>>, vector<4x128xf32>
    tpu.vector_store %arg4[%c0_12, %c0_13], %30 {strides = array<i32>} : memref<4x128xf32, #tpu.memory_space<vmem>>, vector<4x128xf32>,
    return
  }
  func.func @transform_0(%arg0: i32) -> (i32, i32) {
    %c0_i32 = arith.constant 0 : i32
    %c0_i32_0 = arith.constant 0 : i32
    return %arg0, %c0_i32 : i32, i32
  }
  func.func @transform_1(%arg0: i32) -> (i32, i32) {
    %c0_i32 = arith.constant 0 : i32
    %c0_i32_0 = arith.constant 0 : i32
    %c0_i32_1 = arith.constant 0 : i32
    return %c0_i32, %c0_i32_0 : i32, i32
  }
  func.func @transform_2(%arg0: i32) -> (i32, i32) {
    %c0_i32 = arith.constant 0 : i32
    %c0_i32_0 = arith.constant 0 : i32
    %c0_i32_1 = arith.constant 0 : i32
    return %c0_i32, %c0_i32_0 : i32, i32
  }
  func.func @transform_3(%arg0: i32) -> (i32, i32) {
    %c0_i32 = arith.constant 0 : i32
    %c0_i32_0 = arith.constant 0 : i32
    return %arg0, %c0_i32 : i32, i32
  }
}

</mosaic_0001>

<llo_original>
// kernel: tpu_custom_call.1
$region0: #{tpu_custom_call.1}
  #allocation0 [shape = 'u32[]', space=smem, size = 0x4, offset = 0x4, fixed_abs, tag = 'smem constant byte address 0x4 - core index']
  #allocation1 [shape = 'u32[144,128]{1,0:T(1,128)}', space=vmem, size = 0x12000, scoped, tag = 'internal scratch']
  %s0 = inlined_call_operand.hbm [shape: f32[4,128], index: 0, kind: input, shape index: {}]
  %s1 = inlined_call_operand.hbm [shape: f32[128,128], index: 1, kind: input, shape index: {}]
  %s2 = inlined_call_operand.vmem [shape: f32[1,128], index: 2, kind: input, shape index: {}]
  %s3 = inlined_call_operand.hbm [shape: f32[4,128], index: 3, kind: output, shape index: {}]
  %s4 = sld [smem:[#allocation0]]
  $region30: #{tpu_custom_call.1} parent=0
    _
  %s6 = ssub.s32 1, %s4
  %s7 = scalar_select 0, %s6, %s4
  $region1: #{tpu_custom_call.1} parent=0
    #allocation2 [shape = 'u8[2048]{0}', space=vmem, size = 0x800, scoped, tag = 'input window, operand 0, single buffered']
    #allocation3 [shape = 's32[1]{0}', space=sflag, size = 0x4, scoped, tag = 'scoped memory for tpu_custom_call.1']
    #allocation4 [shape = 's32[1]{0}', space=sflag, size = 0x4, scoped, tag = 'scoped memory for tpu_custom_call.1']
    #allocation5 [shape = 'u8[65536]{0}', space=vmem, size = 0x10000, scoped, tag = 'input window, operand 1, single buffered']
    #allocation6 [shape = 's32[1]{0}', space=sflag, size = 0x4, scoped, tag = 'scoped memory for tpu_custom_call.1']
    #allocation7 [shape = 'u8[2048]{0}', space=vmem, size = 0x800, scoped, tag = 'output window, operand 0, single buffered']
    %8 = vsyncpa [#allocation3], 0
    %9 = vsyncpa [#allocation6], 0
    %10 = vsyncpa [#allocation4], 0
    // Predicated region
    $region2: #{tpu_custom_call.1} parent=1 // pred_check
      _
    $region3: #{tpu_custom_call.1} parent=1 // pred_check_branch
      %12 = sbr.rel (0) target = $region5
    $region4: #{tpu_custom_call.1} parent=1 // pred_region
      %s14 = ssub.s32 64, 64
      %15 = vsyncadd [#allocation3], %s14
      %s17 = sshll.u32 [#allocation2], 4
      %s18 = int_to_ptr.vmem [resolvable:$true] %s17
      %20 = dma.hbm_to_vmem [thread:$0]  %s0, 64, %s18, [#allocation3]
    $region5: #{tpu_custom_call.1} parent=1 // pred_fallthru
      _
    // Predicated region
    $region6: #{tpu_custom_call.1} parent=1 // pred_check
      _
    $region7: #{tpu_custom_call.1} parent=1 // pred_check_branch
      %22 = sbr.rel (0) target = $region9
    $region8: #{tpu_custom_call.1} parent=1 // pred_region
      %s24 = ssub.s32 2048, 2048
      %25 = vsyncadd [#allocation6], %s24
      %s26 = sshll.u32 [#allocation5], 4
      %s27 = int_to_ptr.vmem [resolvable:$true] %s26
      %32 = dma.hbm_to_vmem [thread:$0]  %s1, 2048, %s27, [#allocation6], 128, 128, 8
    $region9: #{tpu_custom_call.1} parent=1 // pred_fallthru
      _
    // Predicated region
    $region10: #{tpu_custom_call.1} parent=1 // pred_check
      _
    $region11: #{tpu_custom_call.1} parent=1 // pred_check_branch
      %34 = sbr.rel (0) target = $region13
    $region12: #{tpu_custom_call.1} parent=1 // pred_region
      _
    $region13: #{tpu_custom_call.1} parent=1 // pred_fallthru
      _
    // Predicated region
    $region14: #{tpu_custom_call.1} parent=1 // pred_check
      _
    $region15: #{tpu_custom_call.1} parent=1 // pred_check_branch
      %36 = sbr.rel (0) target = $region17
    $region16: #{tpu_custom_call.1} parent=1 // pred_region
      %37 = dma.done [#allocation3], 64
    $region17: #{tpu_custom_call.1} parent=1 // pred_fallthru
      _
    // Predicated region
    $region18: #{tpu_custom_call.1} parent=1 // pred_check
      _
    $region19: #{tpu_custom_call.1} parent=1 // pred_check_branch
      %39 = sbr.rel (0) target = $region21
    $region20: #{tpu_custom_call.1} parent=1 // pred_region
      %40 = dma.done [#allocation6], 2048
    $region21: #{tpu_custom_call.1} parent=1 // pred_fallthru
      _
    %v41 = vld [vmem:[#allocation2] sm:$0xf]
    %v42 = vld [vmem:[#allocation5] sm:$0xff]
    %v43 = vld [vmem:[#allocation5 + $0x8] sm:$0xff]
    %v44 = vld [vmem:[#allocation5 + $0x10] sm:$0xff]
    %v45 = vld [vmem:[#allocation5 + $0x18] sm:$0xff]
    %v46 = vld [vmem:[#allocation5 + $0x20] sm:$0xff]
    %v47 = vld [vmem:[#allocation5 + $0x28] sm:$0xff]
    %v48 = vld [vmem:[#allocation5 + $0x30] sm:$0xff]
    %v49 = vld [vmem:[#allocation5 + $0x38] sm:$0xff]
    %v50 = vld [vmem:[#allocation5 + $0x40] sm:$0xff]
    %v51 = vld [vmem:[#allocation5 + $0x48] sm:$0xff]
    %v52 = vld [vmem:[#allocation5 + $0x50] sm:$0xff]
    %v53 = vld [vmem:[#allocation5 + $0x58] sm:$0xff]
    %v54 = vld [vmem:[#allocation5 + $0x60] sm:$0xff]
    %v55 = vld [vmem:[#allocation5 + $0x68] sm:$0xff]
    %v56 = vld [vmem:[#allocation5 + $0x70] sm:$0xff]
    %v57 = vld [vmem:[#allocation5 + $0x78] sm:$0xff]
    %v58 = vld [vmem:[%s2] sm:$0x1]
    %v60 = vlaneseq
    %v61 = vshrl.u32 %v60, 7
    %v62 = vsub.s32 0, %v61
    %v63 = vrot.slane %v58, %v62
    %65 = vmatprep.subr.mxu0 0.0
    %66 = vmatpush1.msra.mxu0 %v42
    %67 = vmatprep.subr.mxu0 0.0
    %68 = vmatpush1.msra.mxu0 %v43
    %69 = vmatprep.subr.mxu0 0.0
    %70 = vmatpush1.msra.mxu0 %v44
    %71 = vmatprep.subr.mxu0 0.0
    %72 = vmatpush1.msra.mxu0 %v45
    %73 = vmatprep.subr.mxu0 0.0
    %74 = vmatpush1.msra.mxu0 %v46
    %75 = vmatprep.subr.mxu0 0.0
    %76 = vmatpush1.msra.mxu0 %v47
    %77 = vmatprep.subr.mxu0 0.0
    %78 = vmatpush1.msra.mxu0 %v48
    %79 = vmatprep.subr.mxu0 0.0
    %80 = vmatpush1.msra.mxu0 %v49
    %81 = vmatprep.subr.mxu0 0.0
    %82 = vmatpush1.msra.mxu0 %v50
    %83 = vmatprep.subr.mxu0 0.0
    %84 = vmatpush1.msra.mxu0 %v51
    %85 = vmatprep.subr.mxu0 0.0
    %86 = vmatpush1.msra.mxu0 %v52
    %87 = vmatprep.subr.mxu0 0.0
    %88 = vmatpush1.msra.mxu0 %v53
    %89 = vmatprep.subr.mxu0 0.0
    %90 = vmatpush1.msra.mxu0 %v54
    %91 = vmatprep.subr.mxu0 0.0
    %92 = vmatpush1.msra.mxu0 %v55
    %93 = vmatprep.subr.mxu0 0.0
    %94 = vmatpush1.msra.mxu0 %v56
    %95 = vmatprep.subr.mxu0 0.0
    %96 = vmatpush1.msra.mxu0 %v57
    %97 = vmatprep.subr.mxu0 0.0
    %98 = vmatpush1.msra.mxu0 0.0
    %99 = vmatprep.subr.mxu0 0.0
    %100 = vmatpush1.msra.mxu0 0.0
    %101 = vmatprep.subr.mxu0 0.0
    %102 = vmatpush1.msra.mxu0 0.0
    %103 = vmatprep.subr.mxu0 0.0
    %104 = vmatpush1.msra.mxu0 0.0
    %105 = vmatprep.subr.mxu0 0.0
    %106 = vmatpush1.msra.mxu0 0.0
    %107 = vmatprep.subr.mxu0 0.0
    %108 = vmatpush1.msra.mxu0 0.0
    %109 = vmatprep.subr.mxu0 0.0
    %110 = vmatpush1.msra.mxu0 0.0
    %111 = vmatprep.subr.mxu0 0.0
    %112 = vmatpush1.msra.mxu0 0.0
    %113 = vmatprep.subr.mxu0 0.0
    %114 = vmatpush1.msra.mxu0 0.0
    %115 = vmatprep.subr.mxu0 0.0
    %116 = vmatpush1.msra.mxu0 0.0
    %117 = vmatprep.subr.mxu0 0.0
    %118 = vmatpush1.msra.mxu0 0.0
    %119 = vmatprep.subr.mxu0 0.0
    %120 = vmatpush1.msra.mxu0 0.0
    %121 = vmatprep.subr.mxu0 0.0
    %122 = vmatpush1.msra.mxu0 0.0
    %123 = vmatprep.subr.mxu0 0.0
    %124 = vmatpush1.msra.mxu0 0.0
    %125 = vmatprep.subr.mxu0 0.0
    %126 = vmatpush1.msra.mxu0 0.0
    %127 = vmatprep.subr.mxu0 0.0
    %128 = vmatpush1.msra.mxu0 0.0
    %129 = vmatprep.mubr.f32.mxu0 0.0
    %130 = vmatmul.mubr.f32.gmra.mrb[0].mxu0 %v41
    %v131 = vpop.f32.mrb[0].mxu0
    %v132 = vadd.f32 %v63, %v131
    %v133 = vpop.f32.mrb[0].mxu0
    %134 = vdwg.mxu0
    %v135 = vlaneseq
    %v136 = vand.u32 %v135, 127
    %v137 = vand.u32 %v136, 3
    %vm138 = vcmp.eq.s32.totalorder %v137, 0
    %v139 = vmul.f32 %v132, 2.0
    %v140 = vsel %vm138, %v132, %v139
    %v141 = vxor.u32 %v140, 2147483648
    %v142 = vmul.f32 %v141, 1.442695
    %v143 = vpow.pop %v142
    %v144 = vadd.f32 %v143, 1.0
    %v145 = vrcp.pop %v144
    %v146 = vmul.f32 1.0, %v145
    %vm147 = vcmp.eq.s32.totalorder %v137, 3
    %v148 = vmax.f32 %v132, 0.0
    %v149 = vmul.f32 %v146, 2.0
    %v150 = vsub.f32 %v149, 1.0
    %v151 = vsel %vm138, %v146, %v150
    %v152 = vsel %vm147, %v148, %v151
    %153 = vst [vmem:[#allocation7] sm:$0xf] %v152
    // Predicated region
    $region22: #{tpu_custom_call.1} parent=1 // pred_check
      _
    $region23: #{tpu_custom_call.1} parent=1 // pred_check_branch
      %155 = sbr.rel (0) target = $region25
    $region24: #{tpu_custom_call.1} parent=1 // pred_region
      %s157 = ssub.s32 64, 64
      %158 = vsyncadd [#allocation4], %s157
      %s160 = sshll.u32 [#allocation7], 4
      %s161 = int_to_ptr.vmem [resolvable:$true] %s160
      %163 = dma.vmem_to_hbm [thread:$0]  %s161, 64, %s3, [#allocation4]
    $region25: #{tpu_custom_call.1} parent=1 // pred_fallthru
      _
    // Predicated region
    $region26: #{tpu_custom_call.1} parent=1 // pred_check
      _
    $region27: #{tpu_custom_call.1} parent=1 // pred_check_branch
      %165 = sbr.rel (0) target = $region29
    $region28: #{tpu_custom_call.1} parent=1 // pred_region
      %166 = dma.done [#allocation4], 64
    $region29: #{tpu_custom_call.1} parent=1 // pred_fallthru
      _
    %167 = vsyncpa [#allocation3], 1
    %168 = vsyncpa [#allocation6], 1
    %169 = vsyncpa [#allocation4], 1

</llo_original>
